<compile_context>
chip_gen: v7x
topology: tpu7x:2x2x1
jax: 0.10.0
libtpu: 0.0.40
codegen_flags: <defaults>
</compile_context>

<pallas_src>
import functools
from typing import NamedTuple

import jax
import jax.numpy as jnp
from jax.experimental import pallas as pl
from jax.experimental.pallas import tpu as pltpu


# ----------------------------------------------------------------------------
# Kernels
# ----------------------------------------------------------------------------
def _ffn_partial(x_ref, w13_ref, w2_ref, th):
    """silu(x@w1_h) * (x@w3_h) @ w2_h for one (token, hidden) tile (f32)."""
    x = x_ref[...]
    # One wide MXU matmul produces both w1(x) and w3(x) for this hidden tile.
    h13 = jnp.dot(x, w13_ref[...], preferred_element_type=jnp.float32)
    h1 = h13[:, :th]
    h3 = h13[:, th:]
    # silu + gating in f32 (VPU/EUP), independent of the bf16 MXU operands.
    gated = (h1 * jax.nn.sigmoid(h1)) * h3
    return jnp.dot(gated.astype(w2_ref.dtype), w2_ref[...],
                   preferred_element_type=jnp.float32)


def _ffn_kernel_direct(x_ref, w13_ref, w2_ref, o_ref, *, th):
    """Accumulate straight into the VMEM-resident output tile.

    Valid when the output dtype is f32 (any n_h) or when n_h == 1.
    Saves the (tm, dim) f32 scratch + the zero-fill pass.
    """
    h_idx = pl.program_id(1)
    partial = _ffn_partial(x_ref, w13_ref, w2_ref, th)

    @pl.when(h_idx == 0)
    def _():
        o_ref[...] = partial.astype(o_ref.dtype)

    @pl.when(h_idx > 0)
    def _():
        o_ref[...] += partial.astype(o_ref.dtype)


def _ffn_kernel_scratch(x_ref, w13_ref, w2_ref, o_ref, acc_ref, *, th):
    """f32 scratch accumulator (used when the output dtype is bf16 & n_h>1)."""
    h_idx = pl.program_id(1)
    partial = _ffn_partial(x_ref, w13_ref, w2_ref, th)

    @pl.when(h_idx == 0)
    def _():
        acc_ref[...] = partial          # assign, not zero-fill + add

    @pl.when(h_idx > 0)
    def _():
        acc_ref[...] += partial

    @pl.when(h_idx == pl.num_programs(1) - 1)
    def _():
        o_ref[...] = acc_ref[...].astype(o_ref.dtype)


# ----------------------------------------------------------------------------
# Tile planning (VMEM-budget / roofline driven)
# ----------------------------------------------------------------------------
class FFNPlan(NamedTuple):
    tm: int          # token-tile rows
    th: int          # hidden-tile columns
    w_bufs: int      # weight pipeline buffers (1 / 2 / 3)
    vmem_limit: int  # bytes for CompilerParams.vmem_limit_bytes


def _round_up(x, n):
    return ((x + n - 1) // n) * n


def _vmem_capacity_bytes():
    try:
        cap = getattr(pltpu.get_tpu_info(), "vmem_capacity_bytes", None)
        if cap:
            return int(cap)
    except Exception:
        pass
    return 128 * 1024 * 1024


def _default_max_tm():
    # v5e is already MXU-bound at tm=256; bigger tiles only add VMEM/pipeline
    # pressure there.  v6e/v7x need tm>=512 to clear the ~620-650 FLOP/B ridge
    # (weights are re-streamed once per token tile -> intensity ~ tm FLOP/B).
    try:
        kind = jax.devices()[0].device_kind.lower()
        if "v5 lite" in kind or "v5e" in kind or "v5litepod" in kind:
            return 256
    except Exception:
        pass
    return 512


def _select_tm(m, *, max_tm):
    if m <= 128:
        # Decode-sized: round to a sublane multiple; no fat padding / dead rows.
        return max(8, _round_up(m, 8))
    # Aim for >= 2 token tiles so both v7x TensorCores get work, cap at max_tm.
    half = _round_up((m + 1) // 2, 128)
    return int(min(max_tm, max(128, half)))


def _largest_divisor_tile(hidden, cap):
    """Largest multiple-of-128 divisor of `hidden` that is <= cap."""
    if hidden <= cap:
        return hidden
    divisors = [t for t in range(128, hidden, 128) if hidden % t == 0]
    if not divisors:
        return hidden
    fitting = [t for t in divisors if t <= cap]
    return fitting[-1] if fitting else divisors[0]


def plan_ffn_tiles(m, dim, hidden, *, out_dtype,
                   compute_dtype=jnp.bfloat16, max_tm=None, vmem_cap=None):
    """Pick (tm, th, weight buffers, vmem_limit) from the chip's VMEM budget."""
    if vmem_cap is None:
        vmem_cap = _vmem_capacity_bytes()
    if max_tm is None:
        max_tm = _default_max_tm()
    budget = int(vmem_cap * 0.85)                 # headroom for compiler scratch

    cb = jnp.dtype(compute_dtype).itemsize
    ob = jnp.dtype(out_dtype).itemsize

    tm = _select_tm(m, max_tm=max_tm)

    # Weight-independent VMEM: x tile (2 bufs, compute dtype), out tile
    # (2 bufs), worst-case f32 accumulator.
    fixed = 2 * tm * dim * cb + 2 * tm * dim * ob + tm * dim * 4
    # Double-buffered weight tiles: (dim, 2*th) + (th, dim) = 3*dim*th elems.
    per_th_elem = 2 * 3 * dim * cb
    th_cap = max(128, (budget - fixed) // per_th_elem)
    th = _largest_divisor_tile(hidden, min(int(th_cap), hidden))
    n_h = hidden // th

    w_bufs = 1 if n_h == 1 else 2
    # Triple-buffer weights on 128 MiB chips to hide the h-wrap DMA.
    if (n_h >= 3 and vmem_cap >= 96 * 1024 * 1024
            and fixed + 3 * 3 * dim * th * cb <= budget):
        w_bufs = 3

    need = fixed + w_bufs * 3 * dim * th * cb
    vmem_limit = int(min(vmem_cap, max(int(need * 1.3), 32 * 1024 * 1024)))
    return FFNPlan(int(tm), int(th), int(w_bufs), int(vmem_limit))


# ----------------------------------------------------------------------------
# Weight pre-packing (call ONCE at weight-load time, keyed on th)
# ----------------------------------------------------------------------------
def pack_ffn_weights(w1t, w3t, w2t, th, compute_dtype=jnp.bfloat16):
    """Fuse [w1 | w3] per hidden tile and cast to the MXU compute dtype.

    w1t, w3t: [dim, hidden] (transposed torch Linear weights), w2t: [hidden, dim].
    Returns (w13 [dim, 2*hidden], w2c [hidden, dim]).
    """
    dim, hidden = w1t.shape
    assert w3t.shape == (dim, hidden) and w2t.shape == (hidden, dim)
    assert hidden % th == 0, "hidden tile must divide hidden"
    n_h = hidden // th
    w13 = jnp.concatenate(
        [w1t.reshape(dim, n_h, th), w3t.reshape(dim, n_h, th)], axis=2
    ).reshape(dim, 2 * hidden).astype(compute_dtype)
    return w13, w2t.astype(compute_dtype)


# ----------------------------------------------------------------------------
# Forward
# ----------------------------------------------------------------------------
@functools.partial(
    jax.jit,
    static_argnames=("tm", "th", "w_bufs", "vmem_limit", "compute_dtype"))
def feed_forward_packed(x, w13, w2c, *, tm, th, w_bufs, vmem_limit,
                        compute_dtype=jnp.bfloat16):
    """SwiGLU MLP with pre-packed weights.  x: [batch, seq, dim] -> same."""
    b, s, dim = x.shape
    hidden = w2c.shape[0]
    assert w13.shape == (dim, 2 * hidden) and w2c.shape == (hidden, dim)
    assert hidden % th == 0
    m = b * s
    n_h = hidden // th
    n_m = pl.cdiv(m, tm)
    m_pad = n_m * tm

    x2d = x.reshape(m, dim).astype(compute_dtype)
    if m_pad != m:
        # Zero rows flow through silu(0)*0 == 0 and are sliced off below.
        x2d = jnp.pad(x2d, ((0, m_pad - m), (0, 0)))

    out_dtype = x.dtype
    # f32 outputs (or a single hidden tile) accumulate directly into the
    # VMEM-resident output block; bf16 multi-tile outputs need an f32 scratch.
    use_scratch = (n_h > 1) and (jnp.dtype(out_dtype) != jnp.dtype(jnp.float32))

    wmode = pl.Buffered(1 if n_h == 1 else w_bufs)
    w13_spec = pl.BlockSpec((dim, 2 * th), lambda i, h: (0, h),
                            pipeline_mode=wmode)
    w2_spec = pl.BlockSpec((th, dim), lambda i, h: (h, 0),
                           pipeline_mode=wmode)

    cbytes = jnp.dtype(compute_dtype).itemsize
    obytes = jnp.dtype(out_dtype).itemsize
    cost = pl.CostEstimate(
        flops=6 * m_pad * dim * hidden,                    # 3 matmuls
        transcendentals=m_pad * hidden,                    # sigmoid
        # Weights are re-streamed once per token tile (block index changes at
        # every h reset); x is read once per token tile.
        bytes_accessed=int(n_m * 3 * dim * hidden * cbytes
                           + m_pad * dim * cbytes
                           + m_pad * dim * obytes),
    )

    if use_scratch:
        kernel = functools.partial(_ffn_kernel_scratch, th=th)
        scratch = [pltpu.VMEM((tm, dim), jnp.float32)]
    else:
        kernel = functools.partial(_ffn_kernel_direct, th=th)
        scratch = []

    out2d = pl.pallas_call(
        kernel,
        out_shape=jax.ShapeDtypeStruct((m_pad, dim), out_dtype),
        grid_spec=pltpu.PrefetchScalarGridSpec(
            num_scalar_prefetch=0,
            grid=(n_m, n_h),
            in_specs=[
                pl.BlockSpec((tm, dim), lambda i, h: (i, 0)),   # x tile
                w13_spec,                                       # [w1_h | w3_h]
                w2_spec,                                        # w2_h
            ],
            out_specs=pl.BlockSpec((tm, dim), lambda i, h: (i, 0)),
            scratch_shapes=scratch,
        ),
        compiler_params=pltpu.CompilerParams(
            dimension_semantics=("parallel", "arbitrary"),
            vmem_limit_bytes=int(vmem_limit),
        ),
        cost_estimate=cost,
    )(x2d, w13, w2c)

    if m_pad != m:
        out2d = out2d[:m]
    return out2d.reshape(b, s, dim)


def _ffn_hidden_dim(dim, hidden_dim, multiple_of):
    # Same arithmetic as FeedForward.__init__
    hidden_dim = int(2 * hidden_dim / 3)
    hidden_dim = multiple_of * ((hidden_dim + multiple_of - 1) // multiple_of)
    return hidden_dim


if __name__ == "__main__":
    # Small LLaMA-like config (FeedForward(dim, 4*dim, multiple_of)).
    batch, seq = 2, 8
    dim = 128
    multiple_of = 128
    hidden = _ffn_hidden_dim(dim, 4 * dim, multiple_of)   # -> 384

    key = jax.random.PRNGKey(0)
    kx, k1, k2, k3 = jax.random.split(key, 4)

    x = jax.random.normal(kx, (batch, seq, dim), dtype=jnp.float32)
    # torch Linear weights are (out_features, in_features); keep the transposed
    # (in, out) form so the kernel does plain x @ W.
    w1t = (jax.random.normal(k1, (dim, hidden), dtype=jnp.float32)
           * (1.0 / jnp.sqrt(dim)))
    w3t = (jax.random.normal(k3, (dim, hidden), dtype=jnp.float32)
           * (1.0 / jnp.sqrt(dim)))
    w2t = (jax.random.normal(k2, (hidden, dim), dtype=jnp.float32)
           * (1.0 / jnp.sqrt(hidden)))

    m = batch * seq

    # 1) Planned path: budget-driven tiles, weights packed once outside jit.
    plan = plan_ffn_tiles(m, dim, hidden, out_dtype=x.dtype)
    w13_a, w2_a = pack_ffn_weights(w1t, w3t, w2t, plan.th)
    out_auto = feed_forward_packed(
        x, w13_a, w2_a, tm=plan.tm, th=plan.th,
        w_bufs=plan.w_bufs, vmem_limit=plan.vmem_limit)
    jax.block_until_ready(out_auto)

    # 2) Forced hidden tiling (n_h=3) + token padding + f32 direct-accumulate
    #    into the VMEM-resident output (no scratch).
    w13_t, w2_t = pack_ffn_weights(w1t, w3t, w2t, 128)
    out_tiled = feed_forward_packed(
        x, w13_t, w2_t, tm=256, th=128, w_bufs=2, vmem_limit=plan.vmem_limit)
    jax.block_until_ready(out_tiled)

    # 3) bf16 activations (f32 scratch accumulator path) + triple-buffered
    #    weight tiles across the hidden axis.
    x_bf = x.astype(jnp.bfloat16)
    out_bf16 = feed_forward_packed(
        x_bf, w13_t, w2_t, tm=16, th=128, w_bufs=3, vmem_limit=plan.vmem_limit)
    jax.block_until_ready(out_bf16)

    # Reference with the same bf16 operand quantization the kernel uses
    # (f32 accumulation), so the comparison is tight.
    def q(a):
        return a.astype(jnp.bfloat16).astype(jnp.float32)

    hi = jax.lax.Precision.HIGHEST
    xb, w1b, w3b, w2b = q(x), q(w1t), q(w3t), q(w2t)
    h1 = jnp.einsum("bsd,dh->bsh", xb, w1b, precision=hi)
    h3 = jnp.einsum("bsd,dh->bsh", xb, w3b, precision=hi)
    gated = q(h1 * jax.nn.sigmoid(h1) * h3)
    ref = jnp.einsum("bsh,hd->bsd", gated, w2b, precision=hi)

    assert out_auto.shape == (batch, seq, dim)
    assert out_tiled.shape == (batch, seq, dim)
    assert out_bf16.shape == (batch, seq, dim)
    assert jnp.allclose(out_auto, ref, atol=1e-2, rtol=1e-2)
    assert jnp.allclose(out_tiled, out_auto, atol=1e-3, rtol=1e-3)
    assert jnp.allclose(out_bf16.astype(jnp.float32), ref, atol=5e-2, rtol=5e-2)

    print("KERNEL_OK")
</pallas_src>

<mosaic_0001>
module attributes {stable_mosaic.version = 11 : i64} {
  func.func @_ffn_kernel_direct(%arg0: i32, %arg1: i32, %arg2: memref<16x128xbf16, #tpu.memory_space<vmem>>, %arg3: memref<128x768xbf16, #tpu.memory_space<vmem>>, %arg4: memref<384x128xbf16, #tpu.memory_space<vmem>>, %arg5: memref<16x128xf32, #tpu.memory_space<vmem>>) attributes {dimension_semantics = [#tpu.dimension_semantics<parallel>, #tpu.dimension_semantics<arbitrary>], iteration_bounds = array<i64: 1, 1>, scalar_prefetch = 0 : i64, scratch_operands = 0 : i64, tpu.core_type = #tpu.core_type<tc>, window_params = [{transform_indices = @transform_0, window_bounds = array<i64: 16, 128>}, {pipeline_mode = #tpu.pipeline_mode<synchronous>, transform_indices = @transform_1, window_bounds = array<i64: 128, 768>}, {pipeline_mode = #tpu.pipeline_mode<synchronous>, transform_indices = @transform_2, window_bounds = array<i64: 384, 128>}, {transform_indices = @transform_3, window_bounds = array<i64: 16, 128>}]} {
    %c0 = arith.constant 0 : index
    %c0_0 = arith.constant 0 : index
    %0 = vector.load %arg2[%c0, %c0_0] : memref<16x128xbf16, #tpu.memory_space<vmem>>, vector<16x128xbf16>
    %c0_1 = arith.constant 0 : index
    %c0_2 = arith.constant 0 : index
    %1 = vector.load %arg3[%c0_1, %c0_2] : memref<128x768xbf16, #tpu.memory_space<vmem>>, vector<128x768xbf16>
    %cst = arith.constant dense<0.000000e+00> : vector<16x768xf32>
    %2 = tpu.matmul %0, %1, %cst {dimension_numbers = #tpu.dot_dimension_numbers<[1], [0], [0], [1], [0, 0, 1, 1], [], []>} : vector<16x128xbf16>, vector<128x768xbf16>, vector<16x768xf32> -> vector<16x768xf32>
    %3 = vector.extract_strided_slice %2 {offsets = [0, 0], sizes = [16, 384], strides = [1, 1]} : vector<16x768xf32> to vector<16x384xf32>
    %4 = vector.extract_strided_slice %2 {offsets = [0, 384], sizes = [16, 384], strides = [1, 1]} : vector<16x768xf32> to vector<16x384xf32>
    %5 = arith.negf %3 : vector<16x384xf32>
    %6 = math.exp %5 : vector<16x384xf32>
    %cst_3 = arith.constant 1.000000e+00 : f32
    %7 = vector.broadcast %cst_3 : f32 to vector<16x384xf32>
    %8 = arith.addf %7, %6 : vector<16x384xf32>
    %9 = arith.divf %7, %8 : vector<16x384xf32>
    %10 = arith.mulf %3, %9 : vector<16x384xf32>
    %11 = arith.mulf %10, %4 : vector<16x384xf32>
    %12 = arith.truncf %11 : vector<16x384xf32> to vector<16x384xbf16>
    %c0_4 = arith.constant 0 : index
    %c0_5 = arith.constant 0 : index
    %13 = vector.load %arg4[%c0_4, %c0_5] : memref<384x128xbf16, #tpu.memory_space<vmem>>, vector<384x128xbf16>
    %cst_6 = arith.constant dense<0.000000e+00> : vector<16x128xf32>
    %14 = tpu.matmul %12, %13, %cst_6 {dimension_numbers = #tpu.dot_dimension_numbers<[1], [0], [0], [1], [0, 0, 1, 1], [], []>} : vector<16x384xbf16>, vector<384x128xbf16>, vector<16x128xf32> -> vector<16x128xf32>
    %c0_i32 = arith.constant 0 : i32
    %15 = arith.cmpi eq, %arg1, %c0_i32 : i32
    %16 = arith.extui %15 : i1 to i32
    %c0_i32_7 = arith.constant 0 : i32
    %17 = arith.cmpi ne, %16, %c0_i32_7 : i32
    scf.if %17 {
      %c0_10 = arith.constant 0 : index
      %c0_11 = arith.constant 0 : index
      %21 = vector.load %arg5[%c0_10, %c0_11] : memref<16x128xf32, #tpu.memory_space<vmem>>, vector<16x128xf32>
      tpu.vector_store %arg5[%c0_10, %c0_11], %14 {strides = array<i32>} : memref<16x128xf32, #tpu.memory_space<vmem>>, vector<16x128xf32>,
    } else {
    }
    %c0_i32_8 = arith.constant 0 : i32
    %18 = arith.cmpi sgt, %arg1, %c0_i32_8 : i32
    %19 = arith.extui %18 : i1 to i32
    %c0_i32_9 = arith.constant 0 : i32
    %20 = arith.cmpi ne, %19, %c0_i32_9 : i32
    scf.if %20 {
      %c0_10 = arith.constant 0 : index
      %c0_11 = arith.constant 0 : index
      %21 = vector.load %arg5[%c0_10, %c0_11] : memref<16x128xf32, #tpu.memory_space<vmem>>, vector<16x128xf32>
      %22 = arith.addf %21, %14 : vector<16x128xf32>
      %c0_12 = arith.constant 0 : index
      %c0_13 = arith.constant 0 : index
      %23 = vector.load %arg5[%c0_12, %c0_13] : memref<16x128xf32, #tpu.memory_space<vmem>>, vector<16x128xf32>
      tpu.vector_store %arg5[%c0_12, %c0_13], %22 {strides = array<i32>} : memref<16x128xf32, #tpu.memory_space<vmem>>, vector<16x128xf32>,
    } else {
    }
    return
  }
  func.func @transform_0(%arg0: i32, %arg1: i32) -> (i32, i32) {
    %c0_i32 = arith.constant 0 : i32
    %c0_i32_0 = arith.constant 0 : i32
    return %arg0, %c0_i32 : i32, i32
  }
  func.func @transform_1(%arg0: i32, %arg1: i32) -> (i32, i32) {
    %c0_i32 = arith.constant 0 : i32
    %c0_i32_0 = arith.constant 0 : i32
    return %c0_i32, %arg1 : i32, i32
  }
  func.func @transform_2(%arg0: i32, %arg1: i32) -> (i32, i32) {
    %c0_i32 = arith.constant 0 : i32
    %c0_i32_0 = arith.constant 0 : i32
    return %arg1, %c0_i32 : i32, i32
  }
  func.func @transform_3(%arg0: i32, %arg1: i32) -> (i32, i32) {
    %c0_i32 = arith.constant 0 : i32
    %c0_i32_0 = arith.constant 0 : i32
    return %arg0, %c0_i32 : i32, i32
  }
}

</mosaic_0001>

<llo_original>
// kernel: feed_forward_packed.1
$region0: #{feed_forward_packed.1}
  #allocation0 [shape = 'u32[]', space=smem, size = 0x4, offset = 0x4, fixed_abs, tag = 'smem constant byte address 0x4 - core index']
  #allocation1 [shape = 'u32[144,128]{1,0:T(1,128)}', space=vmem, size = 0x12000, scoped, tag = 'internal scratch']
  %s0 = inlined_call_operand.vmem [shape: bf16[16,128], index: 0, kind: input, shape index: {}]
  %s1 = inlined_call_operand.hbm [shape: bf16[128,768], index: 1, kind: input, shape index: {}]
  %s2 = inlined_call_operand.hbm [shape: bf16[384,128], index: 2, kind: input, shape index: {}]
  %s3 = inlined_call_operand.hbm [shape: f32[16,128], index: 3, kind: output, shape index: {}]
  %s4 = sld [smem:[#allocation0]]
  $region38: #{feed_forward_packed.1} parent=0
    _
  %s6 = ssub.s32 1, %s4
  %s7 = scalar_select 0, %s6, %s4
  $region1: #{feed_forward_packed.1} parent=0
    #allocation2 [shape = 'u8[196608]{0}', space=vmem, size = 0x30000, scoped, tag = 'input window, operand 1, single buffered']
    #allocation3 [shape = 's32[1]{0}', space=sflag, size = 0x4, scoped, tag = 'scoped memory for feed_forward_packed.1']
    #allocation4 [shape = 's32[1]{0}', space=sflag, size = 0x4, scoped, tag = 'scoped memory for feed_forward_packed.1']
    #allocation5 [shape = 'u8[98304]{0}', space=vmem, size = 0x18000, scoped, tag = 'input window, operand 2, single buffered']
    #allocation6 [shape = 's32[1]{0}', space=sflag, size = 0x4, scoped, tag = 'scoped memory for feed_forward_packed.1']
    #allocation7 [shape = 'u8[8192]{0}', space=vmem, size = 0x2000, scoped, tag = 'output window, operand 0, single buffered']
    %8 = vsyncpa [#allocation3], 0
    %9 = vsyncpa [#allocation6], 0
    %10 = vsyncpa [#allocation4], 0
    // Predicated region
    $region2: #{feed_forward_packed.1} parent=1 // pred_check
      _
    $region3: #{feed_forward_packed.1} parent=1 // pred_check_branch
      %12 = sbr.rel (0) target = $region5
    $region4: #{feed_forward_packed.1} parent=1 // pred_region
      _
    $region5: #{feed_forward_packed.1} parent=1 // pred_fallthru
      _
    // Predicated region
    $region6: #{feed_forward_packed.1} parent=1 // pred_check
      _
    $region7: #{feed_forward_packed.1} parent=1 // pred_check_branch
      %14 = sbr.rel (0) target = $region9
    $region8: #{feed_forward_packed.1} parent=1 // pred_region
      %s16 = ssub.s32 6144, 6144
      %17 = vsyncadd [#allocation3], %s16
      %s18 = sshll.u32 [#allocation2], 4
      %s19 = int_to_ptr.vmem [resolvable:$true] %s18
      %24 = dma.hbm_to_vmem [thread:$0]  %s1, 6144, %s19, [#allocation3], 384, 384, 24
    $region9: #{feed_forward_packed.1} parent=1 // pred_fallthru
      _
    // Predicated region
    $region10: #{feed_forward_packed.1} parent=1 // pred_check
      _
    $region11: #{feed_forward_packed.1} parent=1 // pred_check_branch
      %26 = sbr.rel (0) target = $region13
    $region12: #{feed_forward_packed.1} parent=1 // pred_region
      %s28 = ssub.s32 3072, 3072
      %29 = vsyncadd [#allocation6], %s28
      %s30 = sshll.u32 [#allocation5], 4
      %s31 = int_to_ptr.vmem [resolvable:$true] %s30
      %36 = dma.hbm_to_vmem [thread:$0]  %s2, 3072, %s31, [#allocation6], 64, 64, 4
    $region13: #{feed_forward_packed.1} parent=1 // pred_fallthru
      _
    // Predicated region
    $region14: #{feed_forward_packed.1} parent=1 // pred_check
      _
    $region15: #{feed_forward_packed.1} parent=1 // pred_check_branch
      %38 = sbr.rel (0) target = $region17
    $region16: #{feed_forward_packed.1} parent=1 // pred_region
      %39 = dma.done [#allocation3], 6144
    $region17: #{feed_forward_packed.1} parent=1 // pred_fallthru
      _
    // Predicated region
    $region18: #{feed_forward_packed.1} parent=1 // pred_check
      _
    $region19: #{feed_forward_packed.1} parent=1 // pred_check_branch
      %41 = sbr.rel (0) target = $region21
    $region20: #{feed_forward_packed.1} parent=1 // pred_region
      %42 = dma.done [#allocation6], 3072
    $region21: #{feed_forward_packed.1} parent=1 // pred_fallthru
      _
    %v44 = vld [vmem:[%s0] sm:$0xf]
    %v45 = vld [vmem:[%s0 + $0x4] sm:$0xf]
    %v46 = vld [vmem:[#allocation2] sm:$0xff]
    %v47 = vld [vmem:[#allocation2 + $0x8] sm:$0xff]
    %v48 = vld [vmem:[#allocation2 + $0x10] sm:$0xff]
    %v49 = vld [vmem:[#allocation2 + $0x18] sm:$0xff]
    %v50 = vld [vmem:[#allocation2 + $0x20] sm:$0xff]
    %v51 = vld [vmem:[#allocation2 + $0x28] sm:$0xff]
    %v52 = vld [vmem:[#allocation2 + $0x30] sm:$0xff]
    %v53 = vld [vmem:[#allocation2 + $0x38] sm:$0xff]
    %v54 = vld [vmem:[#allocation2 + $0x40] sm:$0xff]
    %v55 = vld [vmem:[#allocation2 + $0x48] sm:$0xff]
    %v56 = vld [vmem:[#allocation2 + $0x50] sm:$0xff]
    %v57 = vld [vmem:[#allocation2 + $0x58] sm:$0xff]
    %v58 = vld [vmem:[#allocation2 + $0x60] sm:$0xff]
    %v59 = vld [vmem:[#allocation2 + $0x68] sm:$0xff]
    %v60 = vld [vmem:[#allocation2 + $0x70] sm:$0xff]
    %v61 = vld [vmem:[#allocation2 + $0x78] sm:$0xff]
    %v62 = vld [vmem:[#allocation2 + $0x80] sm:$0xff]
    %v63 = vld [vmem:[#allocation2 + $0x88] sm:$0xff]
    %v64 = vld [vmem:[#allocation2 + $0x90] sm:$0xff]
    %v65 = vld [vmem:[#allocation2 + $0x98] sm:$0xff]
    %v66 = vld [vmem:[#allocation2 + $0xa0] sm:$0xff]
    %v67 = vld [vmem:[#allocation2 + $0xa8] sm:$0xff]
    %v68 = vld [vmem:[#allocation2 + $0xb0] sm:$0xff]
    %v69 = vld [vmem:[#allocation2 + $0xb8] sm:$0xff]
    %v70 = vld [vmem:[#allocation2 + $0xc0] sm:$0xff]
    %v71 = vld [vmem:[#allocation2 + $0xc8] sm:$0xff]
    %v72 = vld [vmem:[#allocation2 + $0xd0] sm:$0xff]
    %v73 = vld [vmem:[#allocation2 + $0xd8] sm:$0xff]
    %v74 = vld [vmem:[#allocation2 + $0xe0] sm:$0xff]
    %v75 = vld [vmem:[#allocation2 + $0xe8] sm:$0xff]
    %v76 = vld [vmem:[#allocation2 + $0xf0] sm:$0xff]
    %v77 = vld [vmem:[#allocation2 + $0xf8] sm:$0xff]
    %v78 = vld [vmem:[#allocation2 + $0x100] sm:$0xff]
    %v79 = vld [vmem:[#allocation2 + $0x108] sm:$0xff]
    %v80 = vld [vmem:[#allocation2 + $0x110] sm:$0xff]
    %v81 = vld [vmem:[#allocation2 + $0x118] sm:$0xff]
    %v82 = vld [vmem:[#allocation2 + $0x120] sm:$0xff]
    %v83 = vld [vmem:[#allocation2 + $0x128] sm:$0xff]
    %v84 = vld [vmem:[#allocation2 + $0x130] sm:$0xff]
    %v85 = vld [vmem:[#allocation2 + $0x138] sm:$0xff]
    %v86 = vld [vmem:[#allocation2 + $0x140] sm:$0xff]
    %v87 = vld [vmem:[#allocation2 + $0x148] sm:$0xff]
    %v88 = vld [vmem:[#allocation2 + $0x150] sm:$0xff]
    %v89 = vld [vmem:[#allocation2 + $0x158] sm:$0xff]
    %v90 = vld [vmem:[#allocation2 + $0x160] sm:$0xff]
    %v91 = vld [vmem:[#allocation2 + $0x168] sm:$0xff]
    %v92 = vld [vmem:[#allocation2 + $0x170] sm:$0xff]
    %v93 = vld [vmem:[#allocation2 + $0x178] sm:$0xff]
    %v96 = vunpack.c.l.b16 %v44
    %v97 = vunpack.c.l.b16 %v45
    %v98 = vpack.c.b16 %v97, %v96
    %v148 = vunpack.c.l.b16 %v46
    %v149 = vunpack.c.h.b16 %v46
    %v150 = vunpack.c.l.b16 %v47
    %v151 = vunpack.c.h.b16 %v47
    %v152 = vunpack.c.l.b16 %v48
    %v153 = vunpack.c.h.b16 %v48
    %v154 = vunpack.c.l.b16 %v49
    %v155 = vunpack.c.h.b16 %v49
    %v156 = vunpack.c.l.b16 %v50
    %v157 = vunpack.c.h.b16 %v50
    %v158 = vunpack.c.l.b16 %v51
    %v159 = vunpack.c.h.b16 %v51
    %v160 = vunpack.c.l.b16 %v52
    %v161 = vunpack.c.h.b16 %v52
    %v162 = vunpack.c.l.b16 %v53
    %v163 = vunpack.c.h.b16 %v53
    %v164 = vunpack.c.l.b16 %v54
    %v165 = vunpack.c.h.b16 %v54
    %v166 = vunpack.c.l.b16 %v55
    %v167 = vunpack.c.h.b16 %v55
    %v168 = vunpack.c.l.b16 %v56
    %v169 = vunpack.c.h.b16 %v56
    %v170 = vunpack.c.l.b16 %v57
    %v171 = vunpack.c.h.b16 %v57
    %v172 = vunpack.c.l.b16 %v58
    %v173 = vunpack.c.h.b16 %v58
    %v174 = vunpack.c.l.b16 %v59
    %v175 = vunpack.c.h.b16 %v59
    %v176 = vunpack.c.l.b16 %v60
    %v177 = vunpack.c.h.b16 %v60
    %v178 = vunpack.c.l.b16 %v61
    %v179 = vunpack.c.h.b16 %v61
    %v180 = vunpack.c.l.b16 %v62
    %v181 = vunpack.c.h.b16 %v62
    %v182 = vunpack.c.l.b16 %v63
    %v183 = vunpack.c.h.b16 %v63
    %v184 = vunpack.c.l.b16 %v64
    %v185 = vunpack.c.h.b16 %v64
    %v186 = vunpack.c.l.b16 %v65
    %v187 = vunpack.c.h.b16 %v65
    %v188 = vunpack.c.l.b16 %v66
    %v189 = vunpack.c.h.b16 %v66
    %v190 = vunpack.c.l.b16 %v67
    %v191 = vunpack.c.h.b16 %v67
    %v192 = vunpack.c.l.b16 %v68
    %v193 = vunpack.c.h.b16 %v68
    %v194 = vunpack.c.l.b16 %v69
    %v195 = vunpack.c.h.b16 %v69
    %v196 = vunpack.c.l.b16 %v70
    %v197 = vunpack.c.h.b16 %v70
    %v198 = vunpack.c.l.b16 %v71
    %v199 = vunpack.c.h.b16 %v71
    %v200 = vunpack.c.l.b16 %v72
    %v201 = vunpack.c.h.b16 %v72
    %v202 = vunpack.c.l.b16 %v73
    %v203 = vunpack.c.h.b16 %v73
    %v204 = vunpack.c.l.b16 %v74
    %v205 = vunpack.c.h.b16 %v74
    %v206 = vunpack.c.l.b16 %v75
    %v207 = vunpack.c.h.b16 %v75
    %v208 = vunpack.c.l.b16 %v76
    %v209 = vunpack.c.h.b16 %v76
    %v210 = vunpack.c.l.b16 %v77
    %v211 = vunpack.c.h.b16 %v77
    %v212 = vunpack.c.l.b16 %v78
    %v213 = vunpack.c.h.b16 %v78
    %v214 = vunpack.c.l.b16 %v79
    %v215 = vunpack.c.h.b16 %v79
    %v216 = vunpack.c.l.b16 %v80
    %v217 = vunpack.c.h.b16 %v80
    %v218 = vunpack.c.l.b16 %v81
    %v219 = vunpack.c.h.b16 %v81
    %v220 = vunpack.c.l.b16 %v82
    %v221 = vunpack.c.h.b16 %v82
    %v222 = vunpack.c.l.b16 %v83
    %v223 = vunpack.c.h.b16 %v83
    %v224 = vunpack.c.l.b16 %v84
    %v225 = vunpack.c.h.b16 %v84
    %v226 = vunpack.c.l.b16 %v85
    %v227 = vunpack.c.h.b16 %v85
    %v228 = vunpack.c.l.b16 %v86
    %v229 = vunpack.c.h.b16 %v86
    %v230 = vunpack.c.l.b16 %v87
    %v231 = vunpack.c.h.b16 %v87
    %v232 = vunpack.c.l.b16 %v88
    %v233 = vunpack.c.h.b16 %v88
    %v234 = vunpack.c.l.b16 %v89
    %v235 = vunpack.c.h.b16 %v89
    %v236 = vunpack.c.l.b16 %v90
    %v237 = vunpack.c.h.b16 %v90
    %v238 = vunpack.c.l.b16 %v91
    %v239 = vunpack.c.h.b16 %v91
    %v240 = vunpack.c.l.b16 %v92
    %v241 = vunpack.c.h.b16 %v92
    %v242 = vunpack.c.l.b16 %v93
    %v243 = vunpack.c.h.b16 %v93
    %v244 = vpack.c.b16 %v154, %v148
    %v245 = vpack.c.b16 %v155, %v149
    %v246 = vpack.c.b16 %v156, %v150
    %v247 = vpack.c.b16 %v157, %v151
    %v248 = vpack.c.b16 %v158, %v152
    %v249 = vpack.c.b16 %v159, %v153
    %v250 = vpack.c.b16 %v166, %v160
    %v251 = vpack.c.b16 %v167, %v161
    %v252 = vpack.c.b16 %v168, %v162
    %v253 = vpack.c.b16 %v169, %v163
    %v254 = vpack.c.b16 %v170, %v164
    %v255 = vpack.c.b16 %v171, %v165
    %v256 = vpack.c.b16 %v178, %v172
    %v257 = vpack.c.b16 %v179, %v173
    %v258 = vpack.c.b16 %v180, %v174
    %v259 = vpack.c.b16 %v181, %v175
    %v260 = vpack.c.b16 %v182, %v176
    %v261 = vpack.c.b16 %v183, %v177
    %v262 = vpack.c.b16 %v190, %v184
    %v263 = vpack.c.b16 %v191, %v185
    %v264 = vpack.c.b16 %v192, %v186
    %v265 = vpack.c.b16 %v193, %v187
    %v266 = vpack.c.b16 %v194, %v188
    %v267 = vpack.c.b16 %v195, %v189
    %v268 = vpack.c.b16 %v202, %v196
    %v269 = vpack.c.b16 %v203, %v197
    %v270 = vpack.c.b16 %v204, %v198
    %v271 = vpack.c.b16 %v205, %v199
    %v272 = vpack.c.b16 %v206, %v200
    %v273 = vpack.c.b16 %v207, %v201
    %v274 = vpack.c.b16 %v214, %v208
    %v275 = vpack.c.b16 %v215, %v209
    %v276 = vpack.c.b16 %v216, %v210
    %v277 = vpack.c.b16 %v217, %v211
    %v278 = vpack.c.b16 %v218, %v212
    %v279 = vpack.c.b16 %v219, %v213
    %v280 = vpack.c.b16 %v226, %v220
    %v281 = vpack.c.b16 %v227, %v221
    %v282 = vpack.c.b16 %v228, %v222
    %v283 = vpack.c.b16 %v229, %v223
    %v284 = vpack.c.b16 %v230, %v224
    %v285 = vpack.c.b16 %v231, %v225
    %v286 = vpack.c.b16 %v238, %v232
    %v287 = vpack.c.b16 %v239, %v233
    %v288 = vpack.c.b16 %v240, %v234
    %v289 = vpack.c.b16 %v241, %v235
    %v290 = vpack.c.b16 %v242, %v236
    %v291 = vpack.c.b16 %v243, %v237
    %340 = vmatprep.subr.bf16.mxu0 %v245
    %341 = vmatpush1.bf16.msra.mxu0 %v244
    %342 = vmatprep.subr.bf16.mxu0 %v251
    %343 = vmatpush1.bf16.msra.mxu0 %v250
    %344 = vmatprep.subr.bf16.mxu0 %v257
    %345 = vmatpush1.bf16.msra.mxu0 %v256
    %346 = vmatprep.subr.bf16.mxu0 %v263
    %347 = vmatpush1.bf16.msra.mxu0 %v262
    %348 = vmatprep.subr.bf16.mxu0 %v269
    %349 = vmatpush1.bf16.msra.mxu0 %v268
    %350 = vmatprep.subr.bf16.mxu0 %v275
    %351 = vmatpush1.bf16.msra.mxu0 %v274
    %352 = vmatprep.subr.bf16.mxu0 %v281
    %353 = vmatpush1.bf16.msra.mxu0 %v280
    %354 = vmatprep.subr.bf16.mxu0 %v287
    %355 = vmatpush1.bf16.msra.mxu0 %v286
    %356 = vmatprep.subr.bf16.mxu0 0
    %357 = vmatpush1.bf16.msra.mxu0 0
    %358 = vmatprep.subr.bf16.mxu0 0
    %359 = vmatpush1.bf16.msra.mxu0 0
    %360 = vmatprep.subr.bf16.mxu0 0
    %361 = vmatpush1.bf16.msra.mxu0 0
    %362 = vmatprep.subr.bf16.mxu0 0
    %363 = vmatpush1.bf16.msra.mxu0 0
    %364 = vmatprep.subr.bf16.mxu0 0
    %365 = vmatpush1.bf16.msra.mxu0 0
    %366 = vmatprep.subr.bf16.mxu0 0
    %367 = vmatpush1.bf16.msra.mxu0 0
    %368 = vmatprep.subr.bf16.mxu0 0
    %369 = vmatpush1.bf16.msra.mxu0 0
    %370 = vmatprep.subr.bf16.mxu0 0
    %371 = vmatpush1.bf16.msra.mxu0 0
    %372 = vmatprep.mubr.bf16.mxu0 0
    %373 = vmatmul.mubr.bf16.gmra.mrb[0].mxu0 %v98
    %v374 = vpop.f32.mrb[0].mxu0
    %v375 = vadd.f32 0.0, %v374
    %v376 = vpop.f32.mrb[0].mxu0
    %v377 = vadd.f32 0.0, %v376
    %v378 = vpop.f32.mrb[0].mxu0
    %v379 = vadd.f32 0.0, %v378
    %v380 = vpop.f32.mrb[0].mxu0
    %v381 = vadd.f32 0.0, %v380
    %382 = vdwg.mxu0
    %383 = vmatprep.subr.bf16.mxu0 %v247
    %384 = vmatpush1.bf16.msra.mxu0 %v246
    %385 = vmatprep.subr.bf16.mxu0 %v253
    %386 = vmatpush1.bf16.msra.mxu0 %v252
    %387 = vmatprep.subr.bf16.mxu0 %v259
    %388 = vmatpush1.bf16.msra.mxu0 %v258
    %389 = vmatprep.subr.bf16.mxu0 %v265
    %390 = vmatpush1.bf16.msra.mxu0 %v264
    %391 = vmatprep.subr.bf16.mxu0 %v271
    %392 = vmatpush1.bf16.msra.mxu0 %v270
    %393 = vmatprep.subr.bf16.mxu0 %v277
    %394 = vmatpush1.bf16.msra.mxu0 %v276
    %395 = vmatprep.subr.bf16.mxu0 %v283
    %396 = vmatpush1.bf16.msra.mxu0 %v282
    %397 = vmatprep.subr.bf16.mxu0 %v289
    %398 = vmatpush1.bf16.msra.mxu0 %v288
    %399 = vmatprep.subr.bf16.mxu0 0
    %400 = vmatpush1.bf16.msra.mxu0 0
    %401 = vmatprep.subr.bf16.mxu0 0
    %402 = vmatpush1.bf16.msra.mxu0 0
    %403 = vmatprep.subr.bf16.mxu0 0
    %404 = vmatpush1.bf16.msra.mxu0 0
    %405 = vmatprep.subr.bf16.mxu0 0
    %406 = vmatpush1.bf16.msra.mxu0 0
    %407 = vmatprep.subr.bf16.mxu0 0
    %408 = vmatpush1.bf16.msra.mxu0 0
    %409 = vmatprep.subr.bf16.mxu0 0
    %410 = vmatpush1.bf16.msra.mxu0 0
    %411 = vmatprep.subr.bf16.mxu0 0
    %412 = vmatpush1.bf16.msra.mxu0 0
    %413 = vmatprep.subr.bf16.mxu0 0
    %414 = vmatpush1.bf16.msra.mxu0 0
    %415 = vmatprep.mubr.bf16.mxu0 0
    %416 = vmatmul.mubr.bf16.gmra.mrb[0].mxu0 %v98
    %v417 = vpop.f32.mrb[0].mxu0
    %v418 = vadd.f32 0.0, %v417
    %v419 = vpop.f32.mrb[0].mxu0
    %v420 = vadd.f32 0.0, %v419
    %v421 = vpop.f32.mrb[0].mxu0
    %v422 = vadd.f32 0.0, %v421
    %v423 = vpop.f32.mrb[0].mxu0
    %v424 = vadd.f32 0.0, %v423
    %425 = vdwg.mxu0
    %426 = vmatprep.subr.bf16.mxu0 %v249
    %427 = vmatpush1.bf16.msra.mxu0 %v248
    %428 = vmatprep.subr.bf16.mxu0 %v255
    %429 = vmatpush1.bf16.msra.mxu0 %v254
    %430 = vmatprep.subr.bf16.mxu0 %v261
    %431 = vmatpush1.bf16.msra.mxu0 %v260
    %432 = vmatprep.subr.bf16.mxu0 %v267
    %433 = vmatpush1.bf16.msra.mxu0 %v266
    %434 = vmatprep.subr.bf16.mxu0 %v273
    %435 = vmatpush1.bf16.msra.mxu0 %v272
    %436 = vmatprep.subr.bf16.mxu0 %v279
    %437 = vmatpush1.bf16.msra.mxu0 %v278
    %438 = vmatprep.subr.bf16.mxu0 %v285
    %439 = vmatpush1.bf16.msra.mxu0 %v284
    %440 = vmatprep.subr.bf16.mxu0 %v291
    %441 = vmatpush1.bf16.msra.mxu0 %v290
    %442 = vmatprep.subr.bf16.mxu0 0
    %443 = vmatpush1.bf16.msra.mxu0 0
    %444 = vmatprep.subr.bf16.mxu0 0
    %445 = vmatpush1.bf16.msra.mxu0 0
    %446 = vmatprep.subr.bf16.mxu0 0
    %447 = vmatpush1.bf16.msra.mxu0 0
    %448 = vmatprep.subr.bf16.mxu0 0
    %449 = vmatpush1.bf16.msra.mxu0 0
    %450 = vmatprep.subr.bf16.mxu0 0
    %451 = vmatpush1.bf16.msra.mxu0 0
    %452 = vmatprep.subr.bf16.mxu0 0
    %453 = vmatpush1.bf16.msra.mxu0 0
    %454 = vmatprep.subr.bf16.mxu0 0
    %455 = vmatpush1.bf16.msra.mxu0 0
    %456 = vmatprep.subr.bf16.mxu0 0
    %457 = vmatpush1.bf16.msra.mxu0 0
    %458 = vmatprep.mubr.bf16.mxu0 0
    %459 = vmatmul.mubr.bf16.gmra.mrb[0].mxu0 %v98
    %v460 = vpop.f32.mrb[0].mxu0
    %v461 = vadd.f32 0.0, %v460
    %v462 = vpop.f32.mrb[0].mxu0
    %v463 = vadd.f32 0.0, %v462
    %v464 = vpop.f32.mrb[0].mxu0
    %v465 = vadd.f32 0.0, %v464
    %v466 = vpop.f32.mrb[0].mxu0
    %v467 = vadd.f32 0.0, %v466
    %468 = vdwg.mxu0
    %v469 = vxor.u32 %v375, 2147483648
    %v470 = vxor.u32 %v377, 2147483648
    %v471 = vxor.u32 %v418, 2147483648
    %v472 = vxor.u32 %v379, 2147483648
    %v473 = vxor.u32 %v381, 2147483648
    %v474 = vxor.u32 %v422, 2147483648
    %v475 = vmul.f32 %v469, 1.442695
    %v476 = vpow.pop %v475
    %v477 = vmul.f32 %v470, 1.442695
    %v478 = vpow.pop %v477
    %v479 = vmul.f32 %v471, 1.442695
    %v480 = vpow.pop %v479
    %v481 = vmul.f32 %v472, 1.442695
    %v482 = vpow.pop %v481
    %v483 = vmul.f32 %v473, 1.442695
    %v484 = vpow.pop %v483
    %v485 = vmul.f32 %v474, 1.442695
    %v486 = vpow.pop %v485
    %v487 = vadd.f32 %v476, 1.0
    %v488 = vadd.f32 %v478, 1.0
    %v489 = vadd.f32 %v480, 1.0
    %v490 = vadd.f32 %v482, 1.0
    %v491 = vadd.f32 %v484, 1.0
    %v492 = vadd.f32 %v486, 1.0
    %v493 = vrcp.pop %v487
    %v494 = vmul.f32 1.0, %v493
    %v495 = vrcp.pop %v488
    %v496 = vmul.f32 1.0, %v495
    %v497 = vrcp.pop %v489
    %v498 = vmul.f32 1.0, %v497
    %v499 = vrcp.pop %v490
    %v500 = vmul.f32 1.0, %v499
    %v501 = vrcp.pop %v491
    %v502 = vmul.f32 1.0, %v501
    %v503 = vrcp.pop %v492
    %v504 = vmul.f32 1.0, %v503
    %v505 = vmul.f32 %v375, %v494
    %v506 = vmul.f32 %v377, %v496
    %v507 = vmul.f32 %v418, %v498
    %v508 = vmul.f32 %v379, %v500
    %v509 = vmul.f32 %v381, %v502
    %v510 = vmul.f32 %v422, %v504
    %v511 = vmul.f32 %v505, %v420
    %v512 = vmul.f32 %v506, %v461
    %v513 = vmul.f32 %v507, %v463
    %v514 = vmul.f32 %v508, %v424
    %v515 = vmul.f32 %v509, %v465
    %v516 = vmul.f32 %v510, %v467
    %v517 = vpack.c.bf16 %v514, %v511
    %v518 = vpack.c.bf16 %v515, %v512
    %v519 = vpack.c.bf16 %v516, %v513
    %v520 = vld [vmem:[#allocation5] sm:$0xf]
    %v521 = vld [vmem:[#allocation5 + $0x4] sm:$0xf]
    %v522 = vld [vmem:[#allocation5 + $0x8] sm:$0xf]
    %v523 = vld [vmem:[#allocation5 + $0xc] sm:$0xf]
    %v524 = vld [vmem:[#allocation5 + $0x10] sm:$0xf]
    %v525 = vld [vmem:[#allocation5 + $0x14] sm:$0xf]
    %v526 = vld [vmem:[#allocation5 + $0x18] sm:$0xf]
    %v527 = vld [vmem:[#allocation5 + $0x1c] sm:$0xf]
    %v528 = vld [vmem:[#allocation5 + $0x20] sm:$0xf]
    %v529 = vld [vmem:[#allocation5 + $0x24] sm:$0xf]
    %v530 = vld [vmem:[#allocation5 + $0x28] sm:$0xf]
    %v531 = vld [vmem:[#allocation5 + $0x2c] sm:$0xf]
    %v532 = vld [vmem:[#allocation5 + $0x30] sm:$0xf]
    %v533 = vld [vmem:[#allocation5 + $0x34] sm:$0xf]
    %v534 = vld [vmem:[#allocation5 + $0x38] sm:$0xf]
    %v535 = vld [vmem:[#allocation5 + $0x3c] sm:$0xf]
    %v536 = vld [vmem:[#allocation5 + $0x40] sm:$0xf]
    %v537 = vld [vmem:[#allocation5 + $0x44] sm:$0xf]
    %v538 = vld [vmem:[#allocation5 + $0x48] sm:$0xf]
    %v539 = vld [vmem:[#allocation5 + $0x4c] sm:$0xf]
    %v540 = vld [vmem:[#allocation5 + $0x50] sm:$0xf]
    %v541 = vld [vmem:[#allocation5 + $0x54] sm:$0xf]
    %v542 = vld [vmem:[#allocation5 + $0x58] sm:$0xf]
    %v543 = vld [vmem:[#allocation5 + $0x5c] sm:$0xf]
    %v544 = vld [vmem:[#allocation5 + $0x60] sm:$0xf]
    %v545 = vld [vmem:[#allocation5 + $0x64] sm:$0xf]
    %v546 = vld [vmem:[#allocation5 + $0x68] sm:$0xf]
    %v547 = vld [vmem:[#allocation5 + $0x6c] sm:$0xf]
    %v548 = vld [vmem:[#allocation5 + $0x70] sm:$0xf]
    %v549 = vld [vmem:[#allocation5 + $0x74] sm:$0xf]
    %v550 = vld [vmem:[#allocation5 + $0x78] sm:$0xf]
    %v551 = vld [vmem:[#allocation5 + $0x7c] sm:$0xf]
    %v552 = vld [vmem:[#allocation5 + $0x80] sm:$0xf]
    %v553 = vld [vmem:[#allocation5 + $0x84] sm:$0xf]
    %v554 = vld [vmem:[#allocation5 + $0x88] sm:$0xf]
    %v555 = vld [vmem:[#allocation5 + $0x8c] sm:$0xf]
    %v556 = vld [vmem:[#allocation5 + $0x90] sm:$0xf]
    %v557 = vld [vmem:[#allocation5 + $0x94] sm:$0xf]
    %v558 = vld [vmem:[#allocation5 + $0x98] sm:$0xf]
    %v559 = vld [vmem:[#allocation5 + $0x9c] sm:$0xf]
    %v560 = vld [vmem:[#allocation5 + $0xa0] sm:$0xf]
    %v561 = vld [vmem:[#allocation5 + $0xa4] sm:$0xf]
    %v562 = vld [vmem:[#allocation5 + $0xa8] sm:$0xf]
    %v563 = vld [vmem:[#allocation5 + $0xac] sm:$0xf]
    %v564 = vld [vmem:[#allocation5 + $0xb0] sm:$0xf]
    %v565 = vld [vmem:[#allocation5 + $0xb4] sm:$0xf]
    %v566 = vld [vmem:[#allocation5 + $0xb8] sm:$0xf]
    %v567 = vld [vmem:[#allocation5 + $0xbc] sm:$0xf]
    %v616 = vunpack.c.l.b16 %v520
    %v617 = vunpack.c.l.b16 %v521
    %v618 = vunpack.c.l.b16 %v522
    %v619 = vunpack.c.l.b16 %v523
    %v620 = vunpack.c.l.b16 %v524
    %v621 = vunpack.c.l.b16 %v525
    %v622 = vunpack.c.l.b16 %v526
    %v623 = vunpack.c.l.b16 %v527
    %v624 = vunpack.c.l.b16 %v528
    %v625 = vunpack.c.l.b16 %v529
    %v626 = vunpack.c.l.b16 %v530
    %v627 = vunpack.c.l.b16 %v531
    %v628 = vunpack.c.l.b16 %v532
    %v629 = vunpack.c.l.b16 %v533
    %v630 = vunpack.c.l.b16 %v534
    %v631 = vunpack.c.l.b16 %v535
    %v632 = vunpack.c.l.b16 %v536
    %v633 = vunpack.c.l.b16 %v537
    %v634 = vunpack.c.l.b16 %v538
    %v635 = vunpack.c.l.b16 %v539
    %v636 = vunpack.c.l.b16 %v540
    %v637 = vunpack.c.l.b16 %v541
    %v638 = vunpack.c.l.b16 %v542
    %v639 = vunpack.c.l.b16 %v543
    %v640 = vunpack.c.l.b16 %v544
    %v641 = vunpack.c.l.b16 %v545
    %v642 = vunpack.c.l.b16 %v546
    %v643 = vunpack.c.l.b16 %v547
    %v644 = vunpack.c.l.b16 %v548
    %v645 = vunpack.c.l.b16 %v549
    %v646 = vunpack.c.l.b16 %v550
    %v647 = vunpack.c.l.b16 %v551
    %v648 = vunpack.c.l.b16 %v552
    %v649 = vunpack.c.l.b16 %v553
    %v650 = vunpack.c.l.b16 %v554
    %v651 = vunpack.c.l.b16 %v555
    %v652 = vunpack.c.l.b16 %v556
    %v653 = vunpack.c.l.b16 %v557
    %v654 = vunpack.c.l.b16 %v558
    %v655 = vunpack.c.l.b16 %v559
    %v656 = vunpack.c.l.b16 %v560
    %v657 = vunpack.c.l.b16 %v561
    %v658 = vunpack.c.l.b16 %v562
    %v659 = vunpack.c.l.b16 %v563
    %v660 = vunpack.c.l.b16 %v564
    %v661 = vunpack.c.l.b16 %v565
    %v662 = vunpack.c.l.b16 %v566
    %v663 = vunpack.c.l.b16 %v567
    %v664 = vpack.c.b16 %v617, %v616
    %v665 = vpack.c.b16 %v619, %v618
    %v666 = vpack.c.b16 %v621, %v620
    %v667 = vpack.c.b16 %v623, %v622
    %v668 = vpack.c.b16 %v625, %v624
    %v669 = vpack.c.b16 %v627, %v626
    %v670 = vpack.c.b16 %v629, %v628
    %v671 = vpack.c.b16 %v631, %v630
    %v672 = vpack.c.b16 %v633, %v632
    %v673 = vpack.c.b16 %v635, %v634
    %v674 = vpack.c.b16 %v637, %v636
    %v675 = vpack.c.b16 %v639, %v638
    %v676 = vpack.c.b16 %v641, %v640
    %v677 = vpack.c.b16 %v643, %v642
    %v678 = vpack.c.b16 %v645, %v644
    %v679 = vpack.c.b16 %v647, %v646
    %v680 = vpack.c.b16 %v649, %v648
    %v681 = vpack.c.b16 %v651, %v650
    %v682 = vpack.c.b16 %v653, %v652
    %v683 = vpack.c.b16 %v655, %v654
    %v684 = vpack.c.b16 %v657, %v656
    %v685 = vpack.c.b16 %v659, %v658
    %v686 = vpack.c.b16 %v661, %v660
    %v687 = vpack.c.b16 %v663, %v662
    %712 = vmatprep.subr.bf16.mxu0 0
    %713 = vmatpush1.bf16.msra.mxu0 %v664
    %714 = vmatprep.subr.bf16.mxu0 0
    %715 = vmatpush1.bf16.msra.mxu0 %v665
    %716 = vmatprep.subr.bf16.mxu0 0
    %717 = vmatpush1.bf16.msra.mxu0 %v666
    %718 = vmatprep.subr.bf16.mxu0 0
    %719 = vmatpush1.bf16.msra.mxu0 %v667
    %720 = vmatprep.subr.bf16.mxu0 0
    %721 = vmatpush1.bf16.msra.mxu0 %v668
    %722 = vmatprep.subr.bf16.mxu0 0
    %723 = vmatpush1.bf16.msra.mxu0 %v669
    %724 = vmatprep.subr.bf16.mxu0 0
    %725 = vmatpush1.bf16.msra.mxu0 %v670
    %726 = vmatprep.subr.bf16.mxu0 0
    %727 = vmatpush1.bf16.msra.mxu0 %v671
    %728 = vmatprep.subr.bf16.mxu0 0
    %729 = vmatpush1.bf16.msra.mxu0 %v672
    %730 = vmatprep.subr.bf16.mxu0 0
    %731 = vmatpush1.bf16.msra.mxu0 %v673
    %732 = vmatprep.subr.bf16.mxu0 0
    %733 = vmatpush1.bf16.msra.mxu0 %v674
    %734 = vmatprep.subr.bf16.mxu0 0
    %735 = vmatpush1.bf16.msra.mxu0 %v675
    %736 = vmatprep.subr.bf16.mxu0 0
    %737 = vmatpush1.bf16.msra.mxu0 %v676
    %738 = vmatprep.subr.bf16.mxu0 0
    %739 = vmatpush1.bf16.msra.mxu0 %v677
    %740 = vmatprep.subr.bf16.mxu0 0
    %741 = vmatpush1.bf16.msra.mxu0 %v678
    %742 = vmatprep.subr.bf16.mxu0 0
    %743 = vmatpush1.bf16.msra.mxu0 %v679
    %744 = vmatprep.mubr.bf16.mxu0 %v518
    %745 = vmatmul.mubr.bf16.gmra.mrb[0].mxu0 %v517
    %v746 = vpop.f32.mrb[0].mxu0
    %v747 = vadd.f32 0.0, %v746
    %v748 = vpop.f32.mrb[0].mxu0
    %v749 = vpop.f32.mrb[0].mxu0
    %v750 = vadd.f32 0.0, %v749
    %v751 = vpop.f32.mrb[0].mxu0
    %752 = vdwg.mxu0
    %753 = vmatprep.subr.bf16.mxu0 0
    %754 = vmatpush1.bf16.msra.mxu0 %v680
    %755 = vmatprep.subr.bf16.mxu0 0
    %756 = vmatpush1.bf16.msra.mxu0 %v681
    %757 = vmatprep.subr.bf16.mxu0 0
    %758 = vmatpush1.bf16.msra.mxu0 %v682
    %759 = vmatprep.subr.bf16.mxu0 0
    %760 = vmatpush1.bf16.msra.mxu0 %v683
    %761 = vmatprep.subr.bf16.mxu0 0
    %762 = vmatpush1.bf16.msra.mxu0 %v684
    %763 = vmatprep.subr.bf16.mxu0 0
    %764 = vmatpush1.bf16.msra.mxu0 %v685
    %765 = vmatprep.subr.bf16.mxu0 0
    %766 = vmatpush1.bf16.msra.mxu0 %v686
    %767 = vmatprep.subr.bf16.mxu0 0
    %768 = vmatpush1.bf16.msra.mxu0 %v687
    %769 = vmatprep.subr.bf16.mxu0 0
    %770 = vmatpush1.bf16.msra.mxu0 0
    %771 = vmatprep.subr.bf16.mxu0 0
    %772 = vmatpush1.bf16.msra.mxu0 0
    %773 = vmatprep.subr.bf16.mxu0 0
    %774 = vmatpush1.bf16.msra.mxu0 0
    %775 = vmatprep.subr.bf16.mxu0 0
    %776 = vmatpush1.bf16.msra.mxu0 0
    %777 = vmatprep.subr.bf16.mxu0 0
    %778 = vmatpush1.bf16.msra.mxu0 0
    %779 = vmatprep.subr.bf16.mxu0 0
    %780 = vmatpush1.bf16.msra.mxu0 0
    %781 = vmatprep.subr.bf16.mxu0 0
    %782 = vmatpush1.bf16.msra.mxu0 0
    %783 = vmatprep.subr.bf16.mxu0 0
    %784 = vmatpush1.bf16.msra.mxu0 0
    %785 = vmatprep.mubr.bf16.mxu0 0
    %786 = vmatmul.mubr.bf16.gmra.mrb[0].mxu0 %v519
    %v787 = vpop.f32.mrb[0].mxu0
    %v788 = vadd.f32 %v747, %v787
    %v789 = vpop.f32.mrb[0].mxu0
    %v790 = vpop.f32.mrb[0].mxu0
    %v791 = vadd.f32 %v750, %v790
    %v792 = vpop.f32.mrb[0].mxu0
    %793 = vdwg.mxu0
    %p794 = scmp.eq.s32.totalorder 0, 0
    // Predicated region
    $region22: #{feed_forward_packed.1} parent=1 // pred_check
      %p795 = pneg %p794
    $region23: #{feed_forward_packed.1} parent=1 // pred_check_branch
      %797 = sbr.rel (%p795) target = $region25
    $region24: #{feed_forward_packed.1} parent=1 // pred_region
      %798 = vst [vmem:[#allocation7] sm:$0xff] %v788
      %799 = vst [vmem:[#allocation7 + $0x8] sm:$0xff] %v791
    $region25: #{feed_forward_packed.1} parent=1 // pred_fallthru
      _
    %p800 = scmp.gt.s32.totalorder 0, 0
    // Predicated region
    $region26: #{feed_forward_packed.1} parent=1 // pred_check
      %p801 = pneg %p800
    $region27: #{feed_forward_packed.1} parent=1 // pred_check_branch
      %803 = sbr.rel (%p801) target = $region29
    $region28: #{feed_forward_packed.1} parent=1 // pred_region
      %v804 = vld [vmem:[#allocation7] sm:$0xff]
      %v805 = vld [vmem:[#allocation7 + $0x8] sm:$0xff]
      %v806 = vadd.f32 %v804, %v788
      %v807 = vadd.f32 %v805, %v791
      %808 = vst [vmem:[#allocation7] sm:$0xff] %v806
      %809 = vst [vmem:[#allocation7 + $0x8] sm:$0xff] %v807
    $region29: #{feed_forward_packed.1} parent=1 // pred_fallthru
      _
    // Predicated region
    $region30: #{feed_forward_packed.1} parent=1 // pred_check
      _
    $region31: #{feed_forward_packed.1} parent=1 // pred_check_branch
      %811 = sbr.rel (0) target = $region33
    $region32: #{feed_forward_packed.1} parent=1 // pred_region
      %s813 = ssub.s32 256, 256
      %814 = vsyncadd [#allocation4], %s813
      %s815 = sshll.u32 [#allocation7], 4
      %s816 = int_to_ptr.vmem [resolvable:$true] %s815
      %821 = dma.vmem_to_hbm [thread:$0]  %s816, 256, %s3, [#allocation4], 128, 128, 8
    $region33: #{feed_forward_packed.1} parent=1 // pred_fallthru
      _
    // Predicated region
    $region34: #{feed_forward_packed.1} parent=1 // pred_check
      _
    $region35: #{feed_forward_packed.1} parent=1 // pred_check_branch
      %823 = sbr.rel (0) target = $region37
    $region36: #{feed_forward_packed.1} parent=1 // pred_region
      %824 = dma.done [#allocation4], 256
    $region37: #{feed_forward_packed.1} parent=1 // pred_fallthru
      _
    %825 = vsyncpa [#allocation3], 1
    %826 = vsyncpa [#allocation6], 1
    %827 = vsyncpa [#allocation4], 1

</llo_original>
